<compile_context>
chip_gen: v6e
topology: v6e:2x2x1
jax: 0.10.0
libtpu: 0.0.40
codegen_flags: <defaults>
</compile_context>

<pallas_src>
import functools

import jax
import jax.numpy as jnp
from jax import lax
from jax.experimental import pallas as pl
from jax.experimental.pallas import tpu as pltpu


def _round_up(x, m):
    return (x + m - 1) // m * m


@functools.lru_cache()
def _vmem_limit_bytes():
    # v5e / v6e have 128 MiB of physical VMEM, v7x only 64 MiB.  Request ~3/4
    # of whatever this chip has instead of hard-coding one generation's figure.
    try:
        cap = pltpu.get_tpu_info().vmem_capacity_bytes
    except Exception:
        cap = 64 * 1024 * 1024
    return int(cap) * 3 // 4


# ----------------------------------------------------------------------------
# Tiled dense layer (bf16 MXU operands, f32 accumulation)
# ----------------------------------------------------------------------------
def _linear_kernel(x_ref, w_ref, b_ref, o_ref):
    # y = x @ w + b    x: (tm, Cin) bf16   w: (Cin, Cout) bf16   b: (1, Cout) f32
    o_ref[...] = (
        jnp.dot(x_ref[...], w_ref[...], preferred_element_type=jnp.float32)
        + b_ref[...]
    ).astype(o_ref.dtype)


def linear(x2d, w, b, out_dtype=jnp.bfloat16, row_tile=512):
    """Row-tiled dense layer y = x @ w + b.

    Rows are padded up to a multiple of the row tile (instead of degrading to
    tiny divisor tiles) and the pad rows are sliced off afterwards.  The
    weight/bias blocks have constant index_maps (VMEM-resident across steps).
    """
    M, Cin = x2d.shape
    Cout = w.shape[1]
    tm = min(row_tile, _round_up(M, 8))
    Mp = _round_up(M, tm)
    x2d = x2d.astype(jnp.bfloat16)
    if Mp != M:
        x2d = jnp.pad(x2d, ((0, Mp - M), (0, 0)))
    # TODO(synk): mark the resident weight/bias specs pipeline_mode=pl.Buffered(1)
    # to drop the second pipeline buffer once single-buffered constant blocks are
    # universally supported.
    out = pl.pallas_call(
        _linear_kernel,
        out_shape=jax.ShapeDtypeStruct((Mp, Cout), out_dtype),
        grid=(Mp // tm,),
        in_specs=[
            pl.BlockSpec((tm, Cin), lambda i: (i, 0)),      # streamed activations
            pl.BlockSpec((Cin, Cout), lambda i: (0, 0)),    # resident weights
            pl.BlockSpec((1, Cout), lambda i: (0, 0)),      # resident bias
        ],
        out_specs=pl.BlockSpec((tm, Cout), lambda i: (i, 0)),
        compiler_params=pltpu.CompilerParams(
            dimension_semantics=("parallel",),
            vmem_limit_bytes=_vmem_limit_bytes(),
        ),
    )(x2d, w.astype(jnp.bfloat16), b.astype(jnp.float32).reshape(1, Cout))
    return out[:M] if Mp != M else out


# ----------------------------------------------------------------------------
# Attention kernels.  The rel-pos bias is already fused into the contraction:
#   q_ref carries [q*scale | q.Rh | q.Rw]  (Dq = hd + H + W lanes)
#   k_ref carries [k       | E^T        ]  (E is the 0/1 expansion matrix)
# so one dot_general produces scores + decomposed rel-pos bias exactly.
# ----------------------------------------------------------------------------
def _softmax_attn_kernel(q_ref, k_ref, v_ref, o_ref, *, n_k, mask_k):
    """Single-kv-tile specialization (windowed layers): plain softmax."""
    s = lax.dot_general(q_ref[0], k_ref[0], (((1,), (1,)), ((), ())),
                        preferred_element_type=jnp.float32)         # (tq, Nk)
    if mask_k:
        key_idx = lax.broadcasted_iota(jnp.int32, s.shape, 1)
        s = jnp.where(key_idx < n_k, s, -jnp.inf)
    m = jnp.max(s, axis=-1, keepdims=True)
    p = jnp.exp(s - m)
    l = jnp.sum(p, axis=-1, keepdims=True)
    o = jnp.dot(p.astype(v_ref.dtype), v_ref[0],
                preferred_element_type=jnp.float32)                  # (tq, hd)
    o_ref[0] = (o * pl.reciprocal(l, approx=True)).astype(o_ref.dtype)


def _flash_attn_kernel(q_ref, k_ref, v_ref, o_ref, m_sc, l_sc, acc_sc,
                       *, n_k, mask_k):
    """Flash-style online-softmax step over one (group, q-tile, kv-tile)."""
    kv = pl.program_id(2)
    tk = k_ref.shape[1]

    @pl.when(kv == 0)
    def _init():
        m_sc[...] = jnp.full(m_sc.shape, -jnp.inf, m_sc.dtype)
        l_sc[...] = jnp.zeros_like(l_sc)
        acc_sc[...] = jnp.zeros_like(acc_sc)

    s = lax.dot_general(q_ref[0], k_ref[0], (((1,), (1,)), ((), ())),
                        preferred_element_type=jnp.float32)         # (tq, tk)
    if mask_k:
        key_idx = kv * tk + lax.broadcasted_iota(jnp.int32, s.shape, 1)
        s = jnp.where(key_idx < n_k, s, -jnp.inf)

    m_prev = m_sc[...]                                               # (tq, 1)
    m_new = jnp.maximum(m_prev, jnp.max(s, axis=-1, keepdims=True))
    alpha = jnp.exp(m_prev - m_new)
    p = jnp.exp(s - m_new)                                           # (tq, tk)
    l_sc[...] = alpha * l_sc[...] + jnp.sum(p, axis=-1, keepdims=True)
    acc_sc[...] = alpha * acc_sc[...] + jnp.dot(
        p.astype(v_ref.dtype), v_ref[0], preferred_element_type=jnp.float32)
    m_sc[...] = m_new

    @pl.when(kv == pl.num_programs(2) - 1)
    def _finalize():
        o_ref[0] = (acc_sc[...] * pl.reciprocal(l_sc[...], approx=True)
                    ).astype(o_ref.dtype)


# ----------------------------------------------------------------------------
# Plain-JAX glue
# ----------------------------------------------------------------------------
def get_rel_pos_jax(q_size, k_size, rel_pos):
    """JAX port of get_rel_pos (no-interp path: parameter length == 2*max-1)."""
    max_rel_dist = int(2 * max(q_size, k_size) - 1)
    # TODO(synk): the F.interpolate(mode='linear') resize branch is not
    # implemented; the module constructs rel_pos with exactly this length.
    assert rel_pos.shape[0] == max_rel_dist
    q_coords = jnp.arange(q_size)[:, None] * max(k_size / q_size, 1.0)
    k_coords = jnp.arange(k_size)[None, :] * max(q_size / k_size, 1.0)
    rel = (q_coords - k_coords
           + (k_size - 1) * max(q_size / k_size, 1.0)).astype(jnp.int32)
    return rel_pos[rel]                               # (q_size, k_size, head_dim)


def attention_forward(x, params, num_heads, *, q_tile=512, kv_tile=512):
    """Pallas-backed forward pass; mirrors Attention.forward with use_rel_pos=True."""
    B, H, W, C = x.shape
    nh = num_heads
    assert C % nh == 0
    hd = C // nh
    N = H * W
    G = B * nh
    scale = hd ** (-0.5)

    # Fold the softmax scale into the q columns of the qkv projection
    # (compensated below by scaling the rel-pos tables with 1/scale).
    w_qkv = params['w_qkv'].astype(jnp.float32).at[:, :C].multiply(scale)
    b_qkv = params['b_qkv'].astype(jnp.float32).at[:C].multiply(scale)

    # qkv projection: bf16 MXU operands, f32 accumulation, bf16 output.
    qkv = linear(x.reshape(B * N, C), w_qkv, b_qkv, out_dtype=jnp.bfloat16)
    qkv = qkv.reshape(B, N, 3, nh, hd).transpose(2, 0, 3, 1, 4)  # (3, B, nh, N, hd)
    q = qkv[0].reshape(G, N, hd)                                 # softmax scale folded in
    k = qkv[1].reshape(G, N, hd)
    v = qkv[2].reshape(G, N, hd)

    # Decomposed rel-pos projections of q (kv-invariant), hoisted out of the
    # kernel as one batched einsum; 1/scale compensates the folded scale.
    Rh = get_rel_pos_jax(H, H, params['rel_pos_h']).astype(jnp.float32) / scale
    Rw = get_rel_pos_jax(W, W, params['rel_pos_w']).astype(jnp.float32) / scale
    r_q = q.reshape(G, H, W, hd).astype(jnp.float32)
    rel_h = jnp.einsum('ghwc,hkc->ghwk', r_q, Rh)                # (G, H, W, H)
    rel_w = jnp.einsum('ghwc,wkc->ghwk', r_q, Rw)                # (G, H, W, W)
    rel_q = jnp.concatenate(
        [rel_h.reshape(G, N, H), rel_w.reshape(G, N, W)], axis=-1)

    # 0/1 expansion matrix E^T (exact in bf16): column r<H selects keys with
    # k//W == r, column H+r selects keys with k%W == r.
    col = jnp.arange(N)
    Et = jnp.concatenate(
        [(col[:, None] // W) == jnp.arange(H)[None, :],
         (col[:, None] % W) == jnp.arange(W)[None, :]], axis=-1
    ).astype(jnp.bfloat16)                                       # (N, H + W)

    # Fuse the rel-pos bias into the QK^T contraction.
    Dq = hd + H + W
    q_ext = jnp.concatenate([q, rel_q.astype(jnp.bfloat16)], axis=-1)     # (G, N, Dq)
    k_ext = jnp.concatenate([k, jnp.broadcast_to(Et, (G, N, H + W))], axis=-1)

    # Tiling & padding; padded keys are masked in-kernel, padded query rows
    # are discarded after the call (no silent fallback to monolithic tiles).
    tq = min(q_tile, _round_up(N, 8))
    tk = min(kv_tile, _round_up(N, 8))
    Nq = _round_up(N, tq)
    Nk = _round_up(N, tk)
    if Nq != N:
        q_ext = jnp.pad(q_ext, ((0, 0), (0, Nq - N), (0, 0)))
    if Nk != N:
        k_ext = jnp.pad(k_ext, ((0, 0), (0, Nk - N), (0, 0)))
        v = jnp.pad(v, ((0, 0), (0, Nk - N), (0, 0)))
    n_q = Nq // tq
    n_kv = Nk // tk
    mask_k = Nk != N
    vmem_limit = _vmem_limit_bytes()

    if n_kv == 1:
        # Windowed-attention specialization: no online-softmax machinery.
        kern = functools.partial(_softmax_attn_kernel, n_k=N, mask_k=mask_k)
        attn = pl.pallas_call(
            kern,
            out_shape=jax.ShapeDtypeStruct((G, Nq, hd), jnp.bfloat16),
            grid=(G, n_q),
            in_specs=[
                pl.BlockSpec((1, tq, Dq), lambda g, qi: (g, qi, 0)),
                pl.BlockSpec((1, Nk, Dq), lambda g, qi: (g, 0, 0)),
                pl.BlockSpec((1, Nk, hd), lambda g, qi: (g, 0, 0)),
            ],
            out_specs=pl.BlockSpec((1, tq, hd), lambda g, qi: (g, qi, 0)),
            compiler_params=pltpu.CompilerParams(
                dimension_semantics=("parallel", "parallel"),
                vmem_limit_bytes=vmem_limit,
            ),
        )(q_ext, k_ext, v)
    else:
        kern = functools.partial(_flash_attn_kernel, n_k=N, mask_k=mask_k)
        attn = pl.pallas_call(
            kern,
            out_shape=jax.ShapeDtypeStruct((G, Nq, hd), jnp.bfloat16),
            grid=(G, n_q, n_kv),
            in_specs=[
                pl.BlockSpec((1, tq, Dq), lambda g, qi, kv: (g, qi, 0)),
                pl.BlockSpec((1, tk, Dq), lambda g, qi, kv: (g, kv, 0)),
                pl.BlockSpec((1, tk, hd), lambda g, qi, kv: (g, kv, 0)),
            ],
            out_specs=pl.BlockSpec((1, tq, hd), lambda g, qi, kv: (g, qi, 0)),
            scratch_shapes=[
                pltpu.VMEM((tq, 1), jnp.float32),     # running max
                pltpu.VMEM((tq, 1), jnp.float32),     # running sum
                pltpu.VMEM((tq, hd), jnp.float32),    # output accumulator
            ],
            compiler_params=pltpu.CompilerParams(
                # (group, q-tile) axes parallel; kv axis is the online-softmax
                # reduction -> "arbitrary", last in grid.
                dimension_semantics=("parallel", "parallel", "arbitrary"),
                vmem_limit_bytes=vmem_limit,
            ),
        )(q_ext, k_ext, v)

    attn = attn[:, :N, :]                                         # drop padded q rows
    attn = (attn.reshape(B, nh, N, hd)
                .transpose(0, 2, 1, 3)
                .reshape(B * N, C))                               # (B*N, C) bf16

    y = linear(attn, params['w_proj'], params['b_proj'], out_dtype=jnp.float32)
    return y.reshape(B, H, W, C)


def attention_ref(x, params, num_heads):
    """Pure-JAX f32 reference mirroring the PyTorch forward exactly."""
    B, H, W, C = x.shape
    hd = C // num_heads
    N = H * W
    BHh = B * num_heads
    scale = hd ** (-0.5)

    qkv = x.reshape(B, N, C) @ params['w_qkv'] + params['b_qkv']
    qkv = (qkv.reshape(B, N, 3, num_heads, hd)
              .transpose(2, 0, 3, 1, 4)
              .reshape(3, BHh, N, hd))
    q, k, v = qkv[0], qkv[1], qkv[2]

    attn = (q * scale) @ jnp.swapaxes(k, -2, -1)
    Rh = get_rel_pos_jax(H, H, params['rel_pos_h'])
    Rw = get_rel_pos_jax(W, W, params['rel_pos_w'])
    r_q = q.reshape(BHh, H, W, hd)
    rel_h = jnp.einsum('bhwc,hkc->bhwk', r_q, Rh)
    rel_w = jnp.einsum('bhwc,wkc->bhwk', r_q, Rw)
    attn = (attn.reshape(BHh, H, W, H, W)
            + rel_h[:, :, :, :, None]
            + rel_w[:, :, :, None, :]).reshape(BHh, N, N)
    attn = jax.nn.softmax(attn, axis=-1)
    out = (attn @ v).reshape(B, num_heads, H, W, hd)
    out = out.transpose(0, 2, 3, 1, 4).reshape(B, H, W, C)
    return out @ params['w_proj'] + params['b_proj']


# ----------------------------------------------------------------------------
# Main
# ----------------------------------------------------------------------------
if __name__ == "__main__":
    def make_params(key, C, nh, H, W):
        hd = C // nh
        k1, k2, k3, k4, k5, k6 = jax.random.split(key, 6)
        return {
            'w_qkv': 0.05 * jax.random.normal(k1, (C, 3 * C), dtype=jnp.float32),
            'b_qkv': 0.05 * jax.random.normal(k2, (3 * C,), dtype=jnp.float32),
            'w_proj': 0.05 * jax.random.normal(k3, (C, C), dtype=jnp.float32),
            'b_proj': 0.05 * jax.random.normal(k4, (C,), dtype=jnp.float32),
            'rel_pos_h': 0.05 * jax.random.normal(k5, (2 * H - 1, hd), dtype=jnp.float32),
            'rel_pos_w': 0.05 * jax.random.normal(k6, (2 * W - 1, hd), dtype=jnp.float32),
        }

    root = jax.random.PRNGKey(0)
    cases = [
        # (B, H, W, C, nh, q_tile, kv_tile)
        (2, 8, 8, 128, 4, 512, 512),   # single-kv-tile (windowed-style) path
        (2, 8, 8, 128, 4, 32, 32),     # multi-kv-tile flash path
        (1, 6, 6, 64, 2, 16, 16),      # padding + key-mask path (N=36)
    ]
    for idx, (B, H, W, C, nh, tq, tk) in enumerate(cases):
        kp, kx = jax.random.split(jax.random.fold_in(root, idx))
        params = make_params(kp, C, nh, H, W)
        x = jax.random.normal(kx, (B, H, W, C), dtype=jnp.float32)

        y = attention_forward(x, params, nh, q_tile=tq, kv_tile=tk)
        y = jax.block_until_ready(y)
        y_ref = attention_ref(x, params, nh)

        assert y.shape == (B, H, W, C)
        # bf16 MXU operands everywhere (f32 accumulation) + approx reciprocal
        # -> compare to the f32 reference with a correspondingly loose tolerance.
        max_err = float(jnp.max(jnp.abs(y - y_ref)))
        assert jnp.allclose(y, y_ref, atol=3e-2, rtol=3e-2), (idx, max_err)

    print("KERNEL_OK")
</pallas_src>

<mosaic_0001>
module attributes {stable_mosaic.version = 11 : i64} {
  func.func @_linear_kernel(%arg0: i32, %arg1: memref<128x128xbf16, #tpu.memory_space<vmem>>, %arg2: memref<128x384xbf16, #tpu.memory_space<vmem>>, %arg3: memref<1x384xf32, #tpu.memory_space<vmem>>, %arg4: memref<128x384xbf16, #tpu.memory_space<vmem>>) attributes {dimension_semantics = [#tpu.dimension_semantics<parallel>], iteration_bounds = array<i64: 1>, scalar_prefetch = 0 : i64, scratch_operands = 0 : i64, tpu.core_type = #tpu.core_type<tc>, window_params = [{transform_indices = @transform_0, window_bounds = array<i64: 128, 128>}, {pipeline_mode = #tpu.pipeline_mode<synchronous>, transform_indices = @transform_1, window_bounds = array<i64: 128, 384>}, {pipeline_mode = #tpu.pipeline_mode<synchronous>, transform_indices = @transform_2, window_bounds = array<i64: 1, 384>}, {transform_indices = @transform_3, window_bounds = array<i64: 128, 384>}]} {
    %c0 = arith.constant 0 : index
    %c0_0 = arith.constant 0 : index
    %0 = vector.load %arg1[%c0, %c0_0] : memref<128x128xbf16, #tpu.memory_space<vmem>>, vector<128x128xbf16>
    %c0_1 = arith.constant 0 : index
    %c0_2 = arith.constant 0 : index
    %1 = vector.load %arg2[%c0_1, %c0_2] : memref<128x384xbf16, #tpu.memory_space<vmem>>, vector<128x384xbf16>
    %cst = arith.constant dense<0.000000e+00> : vector<128x384xf32>
    %2 = tpu.matmul %0, %1, %cst {dimension_numbers = #tpu.dot_dimension_numbers<[1], [0], [0], [1], [0, 0, 1, 1], [], []>} : vector<128x128xbf16>, vector<128x384xbf16>, vector<128x384xf32> -> vector<128x384xf32>
    %c0_3 = arith.constant 0 : index
    %c0_4 = arith.constant 0 : index
    %3 = vector.load %arg3[%c0_3, %c0_4] : memref<1x384xf32, #tpu.memory_space<vmem>>, vector<1x384xf32>
    %4 = vector.broadcast %3 : vector<1x384xf32> to vector<128x384xf32>
    %5 = arith.addf %2, %4 : vector<128x384xf32>
    %6 = arith.truncf %5 : vector<128x384xf32> to vector<128x384xbf16>
    %c0_5 = arith.constant 0 : index
    %c0_6 = arith.constant 0 : index
    %7 = vector.load %arg4[%c0_5, %c0_6] : memref<128x384xbf16, #tpu.memory_space<vmem>>, vector<128x384xbf16>
    tpu.vector_store %arg4[%c0_5, %c0_6], %6 {strides = array<i32>} : memref<128x384xbf16, #tpu.memory_space<vmem>>, vector<128x384xbf16>,
    return
  }
  func.func @transform_0(%arg0: i32) -> (i32, i32) {
    %c0_i32 = arith.constant 0 : i32
    %c0_i32_0 = arith.constant 0 : i32
    return %arg0, %c0_i32 : i32, i32
  }
  func.func @transform_1(%arg0: i32) -> (i32, i32) {
    %c0_i32 = arith.constant 0 : i32
    %c0_i32_0 = arith.constant 0 : i32
    %c0_i32_1 = arith.constant 0 : i32
    return %c0_i32, %c0_i32_0 : i32, i32
  }
  func.func @transform_2(%arg0: i32) -> (i32, i32) {
    %c0_i32 = arith.constant 0 : i32
    %c0_i32_0 = arith.constant 0 : i32
    %c0_i32_1 = arith.constant 0 : i32
    return %c0_i32, %c0_i32_0 : i32, i32
  }
  func.func @transform_3(%arg0: i32) -> (i32, i32) {
    %c0_i32 = arith.constant 0 : i32
    %c0_i32_0 = arith.constant 0 : i32
    return %arg0, %c0_i32 : i32, i32
  }
}

</mosaic_0001>

<llo_original>
// kernel: tpu_custom_call.1
$region0: #{tpu_custom_call.1}
  #allocation0 [shape = 'u32[]', space=smem, size = 0x4, offset = 0x4, fixed_abs, tag = 'smem constant byte address 0x4 - core index']
  #allocation1 [shape = 'u32[144,128]{1,0:T(1,128)}', space=vmem, size = 0x12000, scoped, tag = 'internal scratch']
  %s0 = inlined_call_operand.hbm [shape: bf16[128,128], index: 0, kind: input, shape index: {}]
  %s1 = inlined_call_operand.hbm [shape: bf16[128,384], index: 1, kind: input, shape index: {}]
  %s2 = inlined_call_operand.vmem [shape: f32[1,384], index: 2, kind: input, shape index: {}]
  %s3 = inlined_call_operand.hbm [shape: bf16[128,384], index: 3, kind: output, shape index: {}]
  %s4 = sld [smem:[#allocation0]]
  $region30: #{tpu_custom_call.1} parent=0
    _
  %s6 = ssub.s32 1, %s4
  %s7 = scalar_select 0, %s6, %s4
  $region1: #{tpu_custom_call.1} parent=0
    #allocation2 [shape = 'u8[32768]{0}', space=vmem, size = 0x8000, scoped, tag = 'input window, operand 0, single buffered']
    #allocation3 [shape = 's32[1]{0}', space=sflag, size = 0x4, scoped, tag = 'scoped memory for tpu_custom_call.1']
    #allocation4 [shape = 's32[1]{0}', space=sflag, size = 0x4, scoped, tag = 'scoped memory for tpu_custom_call.1']
    #allocation5 [shape = 'u8[98304]{0}', space=vmem, size = 0x18000, scoped, tag = 'input window, operand 1, single buffered']
    #allocation6 [shape = 's32[1]{0}', space=sflag, size = 0x4, scoped, tag = 'scoped memory for tpu_custom_call.1']
    #allocation7 [shape = 'u8[98304]{0}', space=vmem, size = 0x18000, scoped, tag = 'output window, operand 0, single buffered']
    %8 = vsyncpa [#allocation3], 0
    %9 = vsyncpa [#allocation6], 0
    %10 = vsyncpa [#allocation4], 0
    // Predicated region
    $region2: #{tpu_custom_call.1} parent=1 // pred_check
      _
    $region3: #{tpu_custom_call.1} parent=1 // pred_check_branch
      %12 = sbr.rel (0) target = $region5
    $region4: #{tpu_custom_call.1} parent=1 // pred_region
      %s14 = ssub.s32 1024, 1024
      %15 = vsyncadd [#allocation3], %s14
      %s16 = sshll.u32 [#allocation2], 4
      %s17 = int_to_ptr.vmem [resolvable:$true] %s16
      %22 = dma.hbm_to_vmem [thread:$0]  %s0, 1024, %s17, [#allocation3], 64, 64, 4
    $region5: #{tpu_custom_call.1} parent=1 // pred_fallthru
      _
    // Predicated region
    $region6: #{tpu_custom_call.1} parent=1 // pred_check
      _
    $region7: #{tpu_custom_call.1} parent=1 // pred_check_branch
      %24 = sbr.rel (0) target = $region9
    $region8: #{tpu_custom_call.1} parent=1 // pred_region
      %s26 = ssub.s32 3072, 3072
      %27 = vsyncadd [#allocation6], %s26
      %s28 = sshll.u32 [#allocation5], 4
      %s29 = int_to_ptr.vmem [resolvable:$true] %s28
      %34 = dma.hbm_to_vmem [thread:$0]  %s1, 3072, %s29, [#allocation6], 192, 192, 12
    $region9: #{tpu_custom_call.1} parent=1 // pred_fallthru
      _
    // Predicated region
    $region10: #{tpu_custom_call.1} parent=1 // pred_check
      _
    $region11: #{tpu_custom_call.1} parent=1 // pred_check_branch
      %36 = sbr.rel (0) target = $region13
    $region12: #{tpu_custom_call.1} parent=1 // pred_region
      _
    $region13: #{tpu_custom_call.1} parent=1 // pred_fallthru
      _
    // Predicated region
    $region14: #{tpu_custom_call.1} parent=1 // pred_check
      _
    $region15: #{tpu_custom_call.1} parent=1 // pred_check_branch
      %38 = sbr.rel (0) target = $region17
    $region16: #{tpu_custom_call.1} parent=1 // pred_region
      %39 = dma.done [#allocation3], 1024
    $region17: #{tpu_custom_call.1} parent=1 // pred_fallthru
      _
    // Predicated region
    $region18: #{tpu_custom_call.1} parent=1 // pred_check
      _
    $region19: #{tpu_custom_call.1} parent=1 // pred_check_branch
      %41 = sbr.rel (0) target = $region21
    $region20: #{tpu_custom_call.1} parent=1 // pred_region
      %42 = dma.done [#allocation6], 3072
    $region21: #{tpu_custom_call.1} parent=1 // pred_fallthru
      _
    %v44 = vld [vmem:[#allocation2] sm:$0xf]
    %v45 = vld [vmem:[#allocation2 + $0x4] sm:$0xf]
    %v46 = vld [vmem:[#allocation2 + $0x8] sm:$0xf]
    %v47 = vld [vmem:[#allocation2 + $0xc] sm:$0xf]
    %v48 = vld [vmem:[#allocation2 + $0x10] sm:$0xf]
    %v49 = vld [vmem:[#allocation2 + $0x14] sm:$0xf]
    %v50 = vld [vmem:[#allocation2 + $0x18] sm:$0xf]
    %v51 = vld [vmem:[#allocation2 + $0x1c] sm:$0xf]
    %v52 = vld [vmem:[#allocation2 + $0x20] sm:$0xf]
    %v53 = vld [vmem:[#allocation2 + $0x24] sm:$0xf]
    %v54 = vld [vmem:[#allocation2 + $0x28] sm:$0xf]
    %v55 = vld [vmem:[#allocation2 + $0x2c] sm:$0xf]
    %v56 = vld [vmem:[#allocation2 + $0x30] sm:$0xf]
    %v57 = vld [vmem:[#allocation2 + $0x34] sm:$0xf]
    %v58 = vld [vmem:[#allocation2 + $0x38] sm:$0xf]
    %v59 = vld [vmem:[#allocation2 + $0x3c] sm:$0xf]
    %v60 = vld [vmem:[#allocation5] sm:$0xff]
    %v61 = vld [vmem:[#allocation5 + $0x8] sm:$0xf]
    %v62 = vld [vmem:[#allocation5 + $0xc] sm:$0xff]
    %v63 = vld [vmem:[#allocation5 + $0x14] sm:$0xf]
    %v64 = vld [vmem:[#allocation5 + $0x18] sm:$0xff]
    %v65 = vld [vmem:[#allocation5 + $0x20] sm:$0xf]
    %v66 = vld [vmem:[#allocation5 + $0x24] sm:$0xff]
    %v67 = vld [vmem:[#allocation5 + $0x2c] sm:$0xf]
    %v68 = vld [vmem:[#allocation5 + $0x30] sm:$0xff]
    %v69 = vld [vmem:[#allocation5 + $0x38] sm:$0xf]
    %v70 = vld [vmem:[#allocation5 + $0x3c] sm:$0xff]
    %v71 = vld [vmem:[#allocation5 + $0x44] sm:$0xf]
    %v72 = vld [vmem:[#allocation5 + $0x48] sm:$0xff]
    %v73 = vld [vmem:[#allocation5 + $0x50] sm:$0xf]
    %v74 = vld [vmem:[#allocation5 + $0x54] sm:$0xff]
    %v75 = vld [vmem:[#allocation5 + $0x5c] sm:$0xf]
    %v76 = vld [vmem:[#allocation5 + $0x60] sm:$0xff]
    %v77 = vld [vmem:[#allocation5 + $0x68] sm:$0xf]
    %v78 = vld [vmem:[#allocation5 + $0x6c] sm:$0xff]
    %v79 = vld [vmem:[#allocation5 + $0x74] sm:$0xf]
    %v80 = vld [vmem:[#allocation5 + $0x78] sm:$0xff]
    %v81 = vld [vmem:[#allocation5 + $0x80] sm:$0xf]
    %v82 = vld [vmem:[#allocation5 + $0x84] sm:$0xff]
    %v83 = vld [vmem:[#allocation5 + $0x8c] sm:$0xf]
    %v84 = vld [vmem:[#allocation5 + $0x90] sm:$0xff]
    %v85 = vld [vmem:[#allocation5 + $0x98] sm:$0xf]
    %v86 = vld [vmem:[#allocation5 + $0x9c] sm:$0xff]
    %v87 = vld [vmem:[#allocation5 + $0xa4] sm:$0xf]
    %v88 = vld [vmem:[#allocation5 + $0xa8] sm:$0xff]
    %v89 = vld [vmem:[#allocation5 + $0xb0] sm:$0xf]
    %v90 = vld [vmem:[#allocation5 + $0xb4] sm:$0xff]
    %v91 = vld [vmem:[#allocation5 + $0xbc] sm:$0xf]
    %v92 = vld [vmem:[%s2] sm:$0x7]
    %v94 = vlaneseq
    %v95 = vshrl.u32 %v94, 7
    %v96 = vsub.s32 0, %v95
    %v97 = vrot.slane %v92, %v96
    %v98 = vlaneseq
    %v99 = vshrl.u32 %v98, 7
    %v100 = vsub.s32 1, %v99
    %v101 = vrot.slane %v92, %v100
    %v102 = vlaneseq
    %v103 = vshrl.u32 %v102, 7
    %v104 = vsub.s32 2, %v103
    %v105 = vrot.slane %v92, %v104
    %v125 = vunpack.c.l.b16 %v44
    %v126 = vunpack.c.l.b16 %v45
    %v127 = vunpack.c.l.b16 %v46
    %v128 = vunpack.c.l.b16 %v47
    %v129 = vunpack.c.l.b16 %v48
    %v130 = vunpack.c.l.b16 %v49
    %v131 = vunpack.c.l.b16 %v50
    %v132 = vunpack.c.l.b16 %v51
    %v133 = vunpack.c.l.b16 %v52
    %v134 = vunpack.c.l.b16 %v53
    %v135 = vunpack.c.l.b16 %v54
    %v136 = vunpack.c.l.b16 %v55
    %v137 = vunpack.c.l.b16 %v56
    %v138 = vunpack.c.l.b16 %v57
    %v139 = vunpack.c.l.b16 %v58
    %v140 = vunpack.c.l.b16 %v59
    %v141 = vpack.c.b16 %v126, %v125
    %v142 = vpack.c.b16 %v128, %v127
    %v143 = vpack.c.b16 %v130, %v129
    %v144 = vpack.c.b16 %v132, %v131
    %v145 = vpack.c.b16 %v134, %v133
    %v146 = vpack.c.b16 %v136, %v135
    %v147 = vpack.c.b16 %v138, %v137
    %v148 = vpack.c.b16 %v140, %v139
    %v189 = vunpack.c.l.b16 %v60
    %v190 = vunpack.c.h.b16 %v60
    %v191 = vunpack.c.l.b16 %v61
    %v192 = vunpack.c.l.b16 %v62
    %v193 = vunpack.c.h.b16 %v62
    %v194 = vunpack.c.l.b16 %v63
    %v195 = vunpack.c.l.b16 %v64
    %v196 = vunpack.c.h.b16 %v64
    %v197 = vunpack.c.l.b16 %v65
    %v198 = vunpack.c.l.b16 %v66
    %v199 = vunpack.c.h.b16 %v66
    %v200 = vunpack.c.l.b16 %v67
    %v201 = vunpack.c.l.b16 %v68
    %v202 = vunpack.c.h.b16 %v68
    %v203 = vunpack.c.l.b16 %v69
    %v204 = vunpack.c.l.b16 %v70
    %v205 = vunpack.c.h.b16 %v70
    %v206 = vunpack.c.l.b16 %v71
    %v207 = vunpack.c.l.b16 %v72
    %v208 = vunpack.c.h.b16 %v72
    %v209 = vunpack.c.l.b16 %v73
    %v210 = vunpack.c.l.b16 %v74
    %v211 = vunpack.c.h.b16 %v74
    %v212 = vunpack.c.l.b16 %v75
    %v213 = vunpack.c.l.b16 %v76
    %v214 = vunpack.c.h.b16 %v76
    %v215 = vunpack.c.l.b16 %v77
    %v216 = vunpack.c.l.b16 %v78
    %v217 = vunpack.c.h.b16 %v78
    %v218 = vunpack.c.l.b16 %v79
    %v219 = vunpack.c.l.b16 %v80
    %v220 = vunpack.c.h.b16 %v80
    %v221 = vunpack.c.l.b16 %v81
    %v222 = vunpack.c.l.b16 %v82
    %v223 = vunpack.c.h.b16 %v82
    %v224 = vunpack.c.l.b16 %v83
    %v225 = vunpack.c.l.b16 %v84
    %v226 = vunpack.c.h.b16 %v84
    %v227 = vunpack.c.l.b16 %v85
    %v228 = vunpack.c.l.b16 %v86
    %v229 = vunpack.c.h.b16 %v86
    %v230 = vunpack.c.l.b16 %v87
    %v231 = vunpack.c.l.b16 %v88
    %v232 = vunpack.c.h.b16 %v88
    %v233 = vunpack.c.l.b16 %v89
    %v234 = vunpack.c.l.b16 %v90
    %v235 = vunpack.c.h.b16 %v90
    %v236 = vunpack.c.l.b16 %v91
    %v237 = vpack.c.b16 %v192, %v189
    %v238 = vpack.c.b16 %v193, %v190
    %v239 = vpack.c.b16 %v194, %v191
    %v240 = vpack.c.b16 %v198, %v195
    %v241 = vpack.c.b16 %v199, %v196
    %v242 = vpack.c.b16 %v200, %v197
    %v243 = vpack.c.b16 %v204, %v201
    %v244 = vpack.c.b16 %v205, %v202
    %v245 = vpack.c.b16 %v206, %v203
    %v246 = vpack.c.b16 %v210, %v207
    %v247 = vpack.c.b16 %v211, %v208
    %v248 = vpack.c.b16 %v212, %v209
    %v249 = vpack.c.b16 %v216, %v213
    %v250 = vpack.c.b16 %v217, %v214
    %v251 = vpack.c.b16 %v218, %v215
    %v252 = vpack.c.b16 %v222, %v219
    %v253 = vpack.c.b16 %v223, %v220
    %v254 = vpack.c.b16 %v224, %v221
    %v255 = vpack.c.b16 %v228, %v225
    %v256 = vpack.c.b16 %v229, %v226
    %v257 = vpack.c.b16 %v230, %v227
    %v258 = vpack.c.b16 %v234, %v231
    %v259 = vpack.c.b16 %v235, %v232
    %v260 = vpack.c.b16 %v236, %v233
    %285 = vmatprep.subr.bf16.mxu0 %v259
    %286 = vmatpush1.bf16.msra.mxu0 %v258
    %287 = vmatprep.subr.bf16.mxu0 %v256
    %288 = vmatpush1.bf16.msra.mxu0 %v255
    %289 = vmatprep.subr.bf16.mxu0 %v253
    %290 = vmatpush1.bf16.msra.mxu0 %v252
    %291 = vmatprep.subr.bf16.mxu0 %v250
    %292 = vmatpush1.bf16.msra.mxu0 %v249
    %293 = vmatprep.subr.bf16.mxu0 %v247
    %294 = vmatpush1.bf16.msra.mxu0 %v246
    %295 = vmatprep.subr.bf16.mxu0 %v244
    %296 = vmatpush1.bf16.msra.mxu0 %v243
    %297 = vmatprep.subr.bf16.mxu0 %v241
    %298 = vmatpush1.bf16.msra.mxu0 %v240
    %299 = vmatprep.subr.bf16.mxu0 %v238
    %300 = vmatpush1.bf16.msra.mxu0 %v237
    %301 = vmatprep.subr.bf16.mxu0 0
    %302 = vmatpush2.bf16.msra.mxu0 0
    %303 = vmatprep.subr.bf16.mxu0 0
    %304 = vmatpush2.bf16.msra.mxu0 0
    %305 = vmatprep.subr.bf16.mxu0 0
    %306 = vmatpush2.bf16.msra.mxu0 0
    %307 = vmatprep.subr.bf16.mxu0 0
    %308 = vmatpush2.bf16.msra.mxu0 0
    %309 = vmatprep.subr.bf16.mxu0 0
    %310 = vmatpush2.bf16.msra.mxu0 0
    %311 = vmatprep.subr.bf16.mxu0 0
    %312 = vmatpush2.bf16.msra.mxu0 0
    %313 = vmatprep.subr.bf16.mxu0 0
    %314 = vmatpush2.bf16.msra.mxu0 0
    %315 = vmatprep.subr.bf16.mxu0 0
    %316 = vmatpush2.bf16.msra.mxu0 0
    %317 = vmatprep.mubr.bf16.mxu0 0
    %318 = vmatmul.mubr.bf16.gmra.mxu0 %v141
    %v319 = vpop.f32.mrf.mxu0
    %v320 = vadd.f32 %v97, %v319
    %v321 = vpop.f32.mrf.mxu0
    %v322 = vadd.f32 %v101, %v321
    %v323 = vpop.f32.mrf.mxu0
    %v324 = vadd.f32 %v97, %v323
    %v325 = vpop.f32.mrf.mxu0
    %v326 = vadd.f32 %v101, %v325
    %327 = vmatprep.mubr.bf16.mxu0 0
    %328 = vmatmul.mubr.bf16.gmra.mxu0 %v142
    %v329 = vpop.f32.mrf.mxu0
    %v330 = vadd.f32 %v97, %v329
    %v331 = vpop.f32.mrf.mxu0
    %v332 = vadd.f32 %v101, %v331
    %v333 = vpop.f32.mrf.mxu0
    %v334 = vadd.f32 %v97, %v333
    %v335 = vpop.f32.mrf.mxu0
    %v336 = vadd.f32 %v101, %v335
    %337 = vmatprep.mubr.bf16.mxu0 0
    %338 = vmatmul.mubr.bf16.gmra.mxu0 %v143
    %v339 = vpop.f32.mrf.mxu0
    %v340 = vadd.f32 %v97, %v339
    %v341 = vpop.f32.mrf.mxu0
    %v342 = vadd.f32 %v101, %v341
    %v343 = vpop.f32.mrf.mxu0
    %v344 = vadd.f32 %v97, %v343
    %v345 = vpop.f32.mrf.mxu0
    %v346 = vadd.f32 %v101, %v345
    %347 = vmatprep.mubr.bf16.mxu0 0
    %348 = vmatmul.mubr.bf16.gmra.mxu0 %v144
    %v349 = vpop.f32.mrf.mxu0
    %v350 = vadd.f32 %v97, %v349
    %v351 = vpop.f32.mrf.mxu0
    %v352 = vadd.f32 %v101, %v351
    %v353 = vpop.f32.mrf.mxu0
    %v354 = vadd.f32 %v97, %v353
    %v355 = vpop.f32.mrf.mxu0
    %v356 = vadd.f32 %v101, %v355
    %357 = vmatprep.mubr.bf16.mxu0 0
    %358 = vmatmul.mubr.bf16.gmra.mxu0 %v145
    %v359 = vpop.f32.mrf.mxu0
    %v360 = vadd.f32 %v97, %v359
    %v361 = vpop.f32.mrf.mxu0
    %v362 = vadd.f32 %v101, %v361
    %v363 = vpop.f32.mrf.mxu0
    %v364 = vadd.f32 %v97, %v363
    %v365 = vpop.f32.mrf.mxu0
    %v366 = vadd.f32 %v101, %v365
    %367 = vmatprep.mubr.bf16.mxu0 0
    %368 = vmatmul.mubr.bf16.gmra.mxu0 %v146
    %v369 = vpop.f32.mrf.mxu0
    %v370 = vadd.f32 %v97, %v369
    %v371 = vpop.f32.mrf.mxu0
    %v372 = vadd.f32 %v101, %v371
    %v373 = vpop.f32.mrf.mxu0
    %v374 = vadd.f32 %v97, %v373
    %v375 = vpop.f32.mrf.mxu0
    %v376 = vadd.f32 %v101, %v375
    %377 = vmatprep.mubr.bf16.mxu0 0
    %378 = vmatmul.mubr.bf16.gmra.mxu0 %v147
    %v379 = vpop.f32.mrf.mxu0
    %v380 = vadd.f32 %v97, %v379
    %v381 = vpop.f32.mrf.mxu0
    %v382 = vadd.f32 %v101, %v381
    %v383 = vpop.f32.mrf.mxu0
    %v384 = vadd.f32 %v97, %v383
    %v385 = vpop.f32.mrf.mxu0
    %v386 = vadd.f32 %v101, %v385
    %387 = vmatprep.mubr.bf16.mxu0 0
    %388 = vmatmul.mubr.bf16.gmra.mxu0 %v148
    %v389 = vpop.f32.mrf.mxu0
    %v390 = vadd.f32 %v97, %v389
    %v391 = vpop.f32.mrf.mxu0
    %v392 = vadd.f32 %v101, %v391
    %v393 = vpop.f32.mrf.mxu0
    %v394 = vadd.f32 %v97, %v393
    %v395 = vpop.f32.mrf.mxu0
    %v396 = vadd.f32 %v101, %v395
    %397 = vdwg.mxu0
    %398 = vmatprep.subr.bf16.mxu0 0
    %399 = vmatpush1.bf16.msra.mxu0 %v260
    %400 = vmatprep.subr.bf16.mxu0 0
    %401 = vmatpush1.bf16.msra.mxu0 %v257
    %402 = vmatprep.subr.bf16.mxu0 0
    %403 = vmatpush1.bf16.msra.mxu0 %v254
    %404 = vmatprep.subr.bf16.mxu0 0
    %405 = vmatpush1.bf16.msra.mxu0 %v251
    %406 = vmatprep.subr.bf16.mxu0 0
    %407 = vmatpush1.bf16.msra.mxu0 %v248
    %408 = vmatprep.subr.bf16.mxu0 0
    %409 = vmatpush1.bf16.msra.mxu0 %v245
    %410 = vmatprep.subr.bf16.mxu0 0
    %411 = vmatpush1.bf16.msra.mxu0 %v242
    %412 = vmatprep.subr.bf16.mxu0 0
    %413 = vmatpush1.bf16.msra.mxu0 %v239
    %414 = vmatprep.subr.bf16.mxu0 0
    %415 = vmatpush2.bf16.msra.mxu0 0
    %416 = vmatprep.subr.bf16.mxu0 0
    %417 = vmatpush2.bf16.msra.mxu0 0
    %418 = vmatprep.subr.bf16.mxu0 0
    %419 = vmatpush2.bf16.msra.mxu0 0
    %420 = vmatprep.subr.bf16.mxu0 0
    %421 = vmatpush2.bf16.msra.mxu0 0
    %422 = vmatprep.subr.bf16.mxu0 0
    %423 = vmatpush2.bf16.msra.mxu0 0
    %424 = vmatprep.subr.bf16.mxu0 0
    %425 = vmatpush2.bf16.msra.mxu0 0
    %426 = vmatprep.subr.bf16.mxu0 0
    %427 = vmatpush2.bf16.msra.mxu0 0
    %428 = vmatprep.subr.bf16.mxu0 0
    %429 = vmatpush2.bf16.msra.mxu0 0
    %430 = vmatprep.mubr.bf16.mxu0 0
    %431 = vmatmul.mubr.bf16.gmra.mxu0 %v141
    %v432 = vpop.f32.mrf.mxu0
    %v433 = vadd.f32 %v105, %v432
    %v434 = vpop.f32.mrf.mxu0
    %v435 = vpop.f32.mrf.mxu0
    %v436 = vadd.f32 %v105, %v435
    %v437 = vpop.f32.mrf.mxu0
    %438 = vmatprep.mubr.bf16.mxu0 0
    %439 = vmatmul.mubr.bf16.gmra.mxu0 %v142
    %v440 = vpop.f32.mrf.mxu0
    %v441 = vadd.f32 %v105, %v440
    %v442 = vpop.f32.mrf.mxu0
    %v443 = vpop.f32.mrf.mxu0
    %v444 = vadd.f32 %v105, %v443
    %v445 = vpop.f32.mrf.mxu0
    %446 = vmatprep.mubr.bf16.mxu0 0
    %447 = vmatmul.mubr.bf16.gmra.mxu0 %v143
    %v448 = vpop.f32.mrf.mxu0
    %v449 = vadd.f32 %v105, %v448
    %v450 = vpop.f32.mrf.mxu0
    %v451 = vpop.f32.mrf.mxu0
    %v452 = vadd.f32 %v105, %v451
    %v453 = vpop.f32.mrf.mxu0
    %454 = vmatprep.mubr.bf16.mxu0 0
    %455 = vmatmul.mubr.bf16.gmra.mxu0 %v144
    %v456 = vpop.f32.mrf.mxu0
    %v457 = vadd.f32 %v105, %v456
    %v458 = vpop.f32.mrf.mxu0
    %v459 = vpop.f32.mrf.mxu0
    %v460 = vadd.f32 %v105, %v459
    %v461 = vpop.f32.mrf.mxu0
    %462 = vmatprep.mubr.bf16.mxu0 0
    %463 = vmatmul.mubr.bf16.gmra.mxu0 %v145
    %v464 = vpop.f32.mrf.mxu0
    %v465 = vadd.f32 %v105, %v464
    %v466 = vpop.f32.mrf.mxu0
    %v467 = vpop.f32.mrf.mxu0
    %v468 = vadd.f32 %v105, %v467
    %v469 = vpop.f32.mrf.mxu0
    %470 = vmatprep.mubr.bf16.mxu0 0
    %471 = vmatmul.mubr.bf16.gmra.mxu0 %v146
    %v472 = vpop.f32.mrf.mxu0
    %v473 = vadd.f32 %v105, %v472
    %v474 = vpop.f32.mrf.mxu0
    %v475 = vpop.f32.mrf.mxu0
    %v476 = vadd.f32 %v105, %v475
    %v477 = vpop.f32.mrf.mxu0
    %478 = vmatprep.mubr.bf16.mxu0 0
    %479 = vmatmul.mubr.bf16.gmra.mxu0 %v147
    %v480 = vpop.f32.mrf.mxu0
    %v481 = vadd.f32 %v105, %v480
    %v482 = vpop.f32.mrf.mxu0
    %v483 = vpop.f32.mrf.mxu0
    %v484 = vadd.f32 %v105, %v483
    %v485 = vpop.f32.mrf.mxu0
    %486 = vmatprep.mubr.bf16.mxu0 0
    %487 = vmatmul.mubr.bf16.gmra.mxu0 %v148
    %v488 = vpop.f32.mrf.mxu0
    %v489 = vadd.f32 %v105, %v488
    %v490 = vpop.f32.mrf.mxu0
    %v491 = vpop.f32.mrf.mxu0
    %v492 = vadd.f32 %v105, %v491
    %v493 = vpop.f32.mrf.mxu0
    %494 = vdwg.mxu0
    %v495 = vpack.c.bf16 %v324, %v320
    %v496 = vpack.c.bf16 %v326, %v322
    %v497 = vpack.c.bf16 %v436, %v433
    %v498 = vpack.c.bf16 %v334, %v330
    %v499 = vpack.c.bf16 %v336, %v332
    %v500 = vpack.c.bf16 %v444, %v441
    %v501 = vpack.c.bf16 %v344, %v340
    %v502 = vpack.c.bf16 %v346, %v342
    %v503 = vpack.c.bf16 %v452, %v449
    %v504 = vpack.c.bf16 %v354, %v350
    %v505 = vpack.c.bf16 %v356, %v352
    %v506 = vpack.c.bf16 %v460, %v457
    %v507 = vpack.c.bf16 %v364, %v360
    %v508 = vpack.c.bf16 %v366, %v362
    %v509 = vpack.c.bf16 %v468, %v465
    %v510 = vpack.c.bf16 %v374, %v370
    %v511 = vpack.c.bf16 %v376, %v372
    %v512 = vpack.c.bf16 %v476, %v473
    %v513 = vpack.c.bf16 %v384, %v380
    %v514 = vpack.c.bf16 %v386, %v382
    %v515 = vpack.c.bf16 %v484, %v481
    %v516 = vpack.c.bf16 %v394, %v390
    %v517 = vpack.c.bf16 %v396, %v392
    %v518 = vpack.c.bf16 %v492, %v489
    %v543 = vunpack.c.l.b16 %v495
    %v544 = vunpack.c.l.b16 %v496
    %v545 = vunpack.c.l.b16 %v497
    %v546 = vunpack.c.h.b16 %v495
    %v547 = vunpack.c.h.b16 %v496
    %v548 = vunpack.c.h.b16 %v497
    %v549 = vunpack.c.l.b16 %v498
    %v550 = vunpack.c.l.b16 %v499
    %v551 = vunpack.c.l.b16 %v500
    %v552 = vunpack.c.h.b16 %v498
    %v553 = vunpack.c.h.b16 %v499
    %v554 = vunpack.c.h.b16 %v500
    %v555 = vunpack.c.l.b16 %v501
    %v556 = vunpack.c.l.b16 %v502
    %v557 = vunpack.c.l.b16 %v503
    %v558 = vunpack.c.h.b16 %v501
    %v559 = vunpack.c.h.b16 %v502
    %v560 = vunpack.c.h.b16 %v503
    %v561 = vunpack.c.l.b16 %v504
    %v562 = vunpack.c.l.b16 %v505
    %v563 = vunpack.c.l.b16 %v506
    %v564 = vunpack.c.h.b16 %v504
    %v565 = vunpack.c.h.b16 %v505
    %v566 = vunpack.c.h.b16 %v506
    %v567 = vunpack.c.l.b16 %v507
    %v568 = vunpack.c.l.b16 %v508
    %v569 = vunpack.c.l.b16 %v509
    %v570 = vunpack.c.h.b16 %v507
    %v571 = vunpack.c.h.b16 %v508
    %v572 = vunpack.c.h.b16 %v509
    %v573 = vunpack.c.l.b16 %v510
    %v574 = vunpack.c.l.b16 %v511
    %v575 = vunpack.c.l.b16 %v512
    %v576 = vunpack.c.h.b16 %v510
    %v577 = vunpack.c.h.b16 %v511
    %v578 = vunpack.c.h.b16 %v512
    %v579 = vunpack.c.l.b16 %v513
    %v580 = vunpack.c.l.b16 %v514
    %v581 = vunpack.c.l.b16 %v515
    %v582 = vunpack.c.h.b16 %v513
    %v583 = vunpack.c.h.b16 %v514
    %v584 = vunpack.c.h.b16 %v515
    %v585 = vunpack.c.l.b16 %v516
    %v586 = vunpack.c.l.b16 %v517
    %v587 = vunpack.c.l.b16 %v518
    %v588 = vunpack.c.h.b16 %v516
    %v589 = vunpack.c.h.b16 %v517
    %v590 = vunpack.c.h.b16 %v518
    %v591 = vpack.c.b16 %v544, %v543
    %v592 = vpack.c.b16 %v545, %v545
    %v593 = vpack.c.b16 %v547, %v546
    %v594 = vpack.c.b16 %v548, %v548
    %v595 = vpack.c.b16 %v550, %v549
    %v596 = vpack.c.b16 %v551, %v551
    %v597 = vpack.c.b16 %v553, %v552
    %v598 = vpack.c.b16 %v554, %v554
    %v599 = vpack.c.b16 %v556, %v555
    %v600 = vpack.c.b16 %v557, %v557
    %v601 = vpack.c.b16 %v559, %v558
    %v602 = vpack.c.b16 %v560, %v560
    %v603 = vpack.c.b16 %v562, %v561
    %v604 = vpack.c.b16 %v563, %v563
    %v605 = vpack.c.b16 %v565, %v564
    %v606 = vpack.c.b16 %v566, %v566
    %v607 = vpack.c.b16 %v568, %v567
    %v608 = vpack.c.b16 %v569, %v569
    %v609 = vpack.c.b16 %v571, %v570
    %v610 = vpack.c.b16 %v572, %v572
    %v611 = vpack.c.b16 %v574, %v573
    %v612 = vpack.c.b16 %v575, %v575
    %v613 = vpack.c.b16 %v577, %v576
    %v614 = vpack.c.b16 %v578, %v578
    %v615 = vpack.c.b16 %v580, %v579
    %v616 = vpack.c.b16 %v581, %v581
    %v617 = vpack.c.b16 %v583, %v582
    %v618 = vpack.c.b16 %v584, %v584
    %v619 = vpack.c.b16 %v586, %v585
    %v620 = vpack.c.b16 %v587, %v587
    %v621 = vpack.c.b16 %v589, %v588
    %v622 = vpack.c.b16 %v590, %v590
    %655 = vst [vmem:[#allocation7] sm:$0xff] %v591
    %656 = vst [vmem:[#allocation7 + $0x8] sm:$0xf] %v592
    %657 = vst [vmem:[#allocation7 + $0xc] sm:$0xff] %v593
    %658 = vst [vmem:[#allocation7 + $0x14] sm:$0xf] %v594
    %659 = vst [vmem:[#allocation7 + $0x18] sm:$0xff] %v595
    %660 = vst [vmem:[#allocation7 + $0x20] sm:$0xf] %v596
    %661 = vst [vmem:[#allocation7 + $0x24] sm:$0xff] %v597
    %662 = vst [vmem:[#allocation7 + $0x2c] sm:$0xf] %v598
    %663 = vst [vmem:[#allocation7 + $0x30] sm:$0xff] %v599
    %664 = vst [vmem:[#allocation7 + $0x38] sm:$0xf] %v600
    %665 = vst [vmem:[#allocation7 + $0x3c] sm:$0xff] %v601
    %666 = vst [vmem:[#allocation7 + $0x44] sm:$0xf] %v602
    %667 = vst [vmem:[#allocation7 + $0x48] sm:$0xff] %v603
    %668 = vst [vmem:[#allocation7 + $0x50] sm:$0xf] %v604
    %669 = vst [vmem:[#allocation7 + $0x54] sm:$0xff] %v605
    %670 = vst [vmem:[#allocation7 + $0x5c] sm:$0xf] %v606
    %671 = vst [vmem:[#allocation7 + $0x60] sm:$0xff] %v607
    %672 = vst [vmem:[#allocation7 + $0x68] sm:$0xf] %v608
    %673 = vst [vmem:[#allocation7 + $0x6c] sm:$0xff] %v609
    %674 = vst [vmem:[#allocation7 + $0x74] sm:$0xf] %v610
    %675 = vst [vmem:[#allocation7 + $0x78] sm:$0xff] %v611
    %676 = vst [vmem:[#allocation7 + $0x80] sm:$0xf] %v612
    %677 = vst [vmem:[#allocation7 + $0x84] sm:$0xff] %v613
    %678 = vst [vmem:[#allocation7 + $0x8c] sm:$0xf] %v614
    %679 = vst [vmem:[#allocation7 + $0x90] sm:$0xff] %v615
    %680 = vst [vmem:[#allocation7 + $0x98] sm:$0xf] %v616
    %681 = vst [vmem:[#allocation7 + $0x9c] sm:$0xff] %v617
    %682 = vst [vmem:[#allocation7 + $0xa4] sm:$0xf] %v618
    %683 = vst [vmem:[#allocation7 + $0xa8] sm:$0xff] %v619
    %684 = vst [vmem:[#allocation7 + $0xb0] sm:$0xf] %v620
    %685 = vst [vmem:[#allocation7 + $0xb4] sm:$0xff] %v621
    %686 = vst [vmem:[#allocation7 + $0xbc] sm:$0xf] %v622
    // Predicated region
    $region22: #{tpu_custom_call.1} parent=1 // pred_check
      _
    $region23: #{tpu_custom_call.1} parent=1 // pred_check_branch
      %688 = sbr.rel (0) target = $region25
    $region24: #{tpu_custom_call.1} parent=1 // pred_region
      %s690 = ssub.s32 3072, 3072
      %691 = vsyncadd [#allocation4], %s690
      %s692 = sshll.u32 [#allocation7], 4
      %s693 = int_to_ptr.vmem [resolvable:$true] %s692
      %698 = dma.vmem_to_hbm [thread:$0]  %s693, 3072, %s3, [#allocation4], 192, 192, 12
    $region25: #{tpu_custom_call.1} parent=1 // pred_fallthru
      _
    // Predicated region
    $region26: #{tpu_custom_call.1} parent=1 // pred_check
      _
    $region27: #{tpu_custom_call.1} parent=1 // pred_check_branch
      %700 = sbr.rel (0) target = $region29
    $region28: #{tpu_custom_call.1} parent=1 // pred_region
      %701 = dma.done [#allocation4], 3072
    $region29: #{tpu_custom_call.1} parent=1 // pred_fallthru
      _
    %702 = vsyncpa [#allocation3], 1
    %703 = vsyncpa [#allocation6], 1
    %704 = vsyncpa [#allocation4], 1

</llo_original>
